<compile_context>
chip_gen: v7x
topology: tpu7x:2x2x1
jax: 0.10.0
libtpu: 0.0.40
codegen_flags: <defaults>
</compile_context>

<pallas_src>
import jax
import jax.numpy as jnp
from jax import lax
from jax.experimental import pallas as pl
from jax.experimental.pallas import tpu as pltpu
import numpy as np

LANE = 128


def _round_up(x, m):
    return ((x + m - 1) // m) * m


def rep_gemm_kernel(x_ref, w_ref, b_ref, o_ref, acc_ref):
    """Tiled GEMM + bias + cast (one fused rep-conv).

    x_ref  : (TM, TK)  bf16  im2col'd activation rows (BN_in+ReLU already applied)
    w_ref  : (TK, TN)  bf16  branch-fused conv weights, taps packed into K
    b_ref  : (1,  TN)  f32   branch-fused bias
    o_ref  : (TM, TN)  bf16  output rows
    acc_ref: (TM, TN)  f32   VMEM accumulator, persists across the K grid axis
    """
    @pl.when(pl.program_id(2) == 0)
    def _():
        acc_ref[...] = jnp.zeros_like(acc_ref)

    acc_ref[...] += jnp.dot(x_ref[...], w_ref[...],
                            preferred_element_type=jnp.float32)

    @pl.when(pl.program_id(2) == pl.num_programs(2) - 1)
    def _():
        o_ref[...] = (acc_ref[...] + b_ref[...]).astype(o_ref.dtype)


def rep_parallel_forward(x_nchw, params, *, tm=256, tn=256, tk=512):
    """NCHW in -> NCHW out (matches the PyTorch module; inference mode)."""
    N, Cin, H, W = x_nchw.shape
    w1, w2 = params["w1"], params["w2"]                      # (3,3,Cin,Cout) HWIO
    Cout = w1.shape[-1]

    # ---- host-side branch reparameterization (exact for inference-mode BN) ----
    w_fused = (w1 * params["s1"][None, None, None, :]
               + w2 * params["s2"][None, None, None, :])     # (3,3,Cin,Cout)
    b_fused = params["b1"] + params["b2"]                    # (Cout,)

    # ---- tile geometry ----
    K = 9 * Cin                                              # taps packed into K
    M = N * H * W                                            # rows from all images
    TM = min(tm, _round_up(M, 8))
    TN = tn if _round_up(Cout, LANE) > tn else _round_up(Cout, LANE)
    TK = tk if _round_up(K, LANE) > tk else _round_up(K, LANE)
    M_p = _round_up(M, TM)
    K_p = _round_up(K, TK)
    C_p = _round_up(Cout, TN)

    # ---- input path: BN_in + ReLU + bf16 + zero-pad + im2col (one XLA pass) ----
    x = jnp.transpose(x_nchw, (0, 2, 3, 1)).astype(jnp.float32)      # NHWC
    y = jnp.maximum(x * params["sin"] + params["bin"], 0.0).astype(jnp.bfloat16)
    yp = jnp.pad(y, ((0, 0), (1, 1), (1, 1), (0, 0)))                # conv pad=1
    patches = jnp.concatenate(
        [yp[:, dy:dy + H, dx:dx + W, :] for dy in range(3) for dx in range(3)],
        axis=-1)                                                     # (N,H,W,9*Cin)
    patches = patches.reshape(M, K)
    patches = jnp.pad(patches, ((0, M_p - M), (0, K_p - K)))         # lane/row pad

    # Weight as a (K, Cout) matrix with the SAME (dy, dx, cin) ordering as the
    # concatenation above; fused bias as a (1, Cout) row.
    w_mat = jnp.pad(w_fused.reshape(K, Cout).astype(jnp.bfloat16),
                    ((0, K_p - K), (0, C_p - Cout)))
    b_row = jnp.pad(b_fused, (0, C_p - Cout)).reshape(1, C_p).astype(jnp.float32)

    grid = (M_p // TM, C_p // TN, K_p // TK)
    flops = 2 * M_p * K_p * C_p
    bytes_accessed = (M_p * K_p * 2 + K_p * C_p * 2 + C_p * 4 + M_p * C_p * 2)

    out = pl.pallas_call(
        rep_gemm_kernel,
        out_shape=jax.ShapeDtypeStruct((M_p, C_p), jnp.bfloat16),
        grid=grid,
        in_specs=[
            pl.BlockSpec((TM, TK), lambda m, n, k: (m, k)),   # activation rows
            pl.BlockSpec((TK, TN), lambda m, n, k: (k, n)),   # fused weights
            pl.BlockSpec((1, TN), lambda m, n, k: (0, n)),    # fused bias
        ],
        out_specs=pl.BlockSpec((TM, TN), lambda m, n, k: (m, n)),
        scratch_shapes=[pltpu.VMEM((TM, TN), jnp.float32)],
        compiler_params=pltpu.CompilerParams(
            dimension_semantics=("parallel", "parallel", "arbitrary"),
            # blocks total <~2 MiB double-buffered; 32 MiB leaves ample headroom
            # even on v7x's 64 MiB VMEM.
            vmem_limit_bytes=32 * 1024 * 1024),
        cost_estimate=pl.CostEstimate(flops=flops, transcendentals=0,
                                      bytes_accessed=bytes_accessed),
    )(patches, w_mat, b_row)

    out = out[:M, :Cout].reshape(N, H, W, Cout)
    # TODO(synk): when stacking these blocks, keep activations NHWC (and
    # channel-padded) between layers and fuse the next BN+ReLU into the
    # epilogue instead of transposing back to NCHW every call.
    return jnp.transpose(out, (0, 3, 1, 2))                  # NHWC -> NCHW, bf16


def make_params(key, cin, cout, eps=1e-3):
    """Deterministic synthetic parameters (conv weights + 3 BatchNorms),
    each BN folded to an affine (scale, bias) pair (inference mode)."""
    ks = jax.random.split(key, 16)

    w1 = 0.1 * jax.random.normal(ks[0], (3, 3, cin, cout), jnp.float32)
    w2 = 0.1 * jax.random.normal(ks[1], (3, 3, cin, cout), jnp.float32)

    def bn_affine(kg, kb, km, kv, c):
        gamma = jax.random.uniform(kg, (c,), jnp.float32, 0.5, 1.5)
        beta = 0.1 * jax.random.normal(kb, (c,), jnp.float32)
        mean = 0.1 * jax.random.normal(km, (c,), jnp.float32)
        var = jax.random.uniform(kv, (c,), jnp.float32, 0.5, 1.5)
        scale = gamma / jnp.sqrt(var + eps)
        bias = beta - mean * scale
        return scale, bias

    sin, bin_ = bn_affine(ks[2], ks[3], ks[4], ks[5], cin)      # self.norm
    s1, b1 = bn_affine(ks[6], ks[7], ks[8], ks[9], cout)        # parallel1.bn
    s2, b2 = bn_affine(ks[10], ks[11], ks[12], ks[13], cout)    # parallel2.bn

    return dict(w1=w1, w2=w2, sin=sin, bin=bin_, s1=s1, b1=b1, s2=s2, b2=b2)


def ref_forward(x_nchw, p):
    """Pure-JAX f32 reference (two explicit conv branches, XLA convs)."""
    x = jnp.transpose(x_nchw, (0, 2, 3, 1)).astype(jnp.float32)      # NHWC
    y = jnp.maximum(x * p["sin"] + p["bin"], 0.0)
    dn = lax.conv_dimension_numbers(y.shape, p["w1"].shape, ("NHWC", "HWIO", "NHWC"))
    o1 = lax.conv_general_dilated(y, p["w1"], (1, 1), "SAME", dimension_numbers=dn)
    o2 = lax.conv_general_dilated(y, p["w2"], (1, 1), "SAME", dimension_numbers=dn)
    out = o1 * p["s1"] + p["b1"] + o2 * p["s2"] + p["b2"]
    return jnp.transpose(out, (0, 3, 1, 2))                          # NCHW


if __name__ == "__main__":
    key = jax.random.PRNGKey(0)
    k_x, k_p = jax.random.split(key)

    N, Cin, Cout, H, W = 2, 4, 8, 16, 16
    x = jax.random.normal(k_x, (N, Cin, H, W), jnp.float32)          # NCHW like torch
    params = make_params(k_p, Cin, Cout)

    fwd = jax.jit(rep_parallel_forward)
    out = jax.block_until_ready(fwd(x, params))
    ref = jax.block_until_ready(ref_forward(x, params))

    assert out.shape == (N, Cout, H, W)
    # bf16 matmul inputs + bf16 output store (f32 accumulation) vs f32 reference.
    np.testing.assert_allclose(np.asarray(out.astype(jnp.float32)),
                               np.asarray(ref),
                               rtol=2e-2, atol=3e-2)

    print("KERNEL_OK")
</pallas_src>

<mosaic_0001>
module attributes {stable_mosaic.version = 11 : i64} {
  func.func @rep_gemm_kernel(%arg0: i32, %arg1: i32, %arg2: i32, %arg3: memref<256x128xbf16, #tpu.memory_space<vmem>>, %arg4: memref<128x128xbf16, #tpu.memory_space<vmem>>, %arg5: memref<1x128xf32, #tpu.memory_space<vmem>>, %arg6: memref<256x128xbf16, #tpu.memory_space<vmem>>, %arg7: memref<256x128xf32, #tpu.memory_space<vmem>>) attributes {dimension_semantics = [#tpu.dimension_semantics<parallel>, #tpu.dimension_semantics<parallel>, #tpu.dimension_semantics<arbitrary>], iteration_bounds = array<i64: 2, 1, 1>, scalar_prefetch = 0 : i64, scratch_operands = 1 : i64, tpu.core_type = #tpu.core_type<tc>, window_params = [{transform_indices = @transform_0, window_bounds = array<i64: 256, 128>}, {transform_indices = @transform_1, window_bounds = array<i64: 128, 128>}, {transform_indices = @transform_2, window_bounds = array<i64: 1, 128>}, {transform_indices = @transform_3, window_bounds = array<i64: 256, 128>}]} {
    %c0_i32 = arith.constant 0 : i32
    %0 = arith.cmpi eq, %arg2, %c0_i32 : i32
    %1 = arith.extui %0 : i1 to i32
    %c0_i32_0 = arith.constant 0 : i32
    %2 = arith.cmpi ne, %1, %c0_i32_0 : i32
    scf.if %2 {
      %cst_10 = arith.constant 0.000000e+00 : f32
      %12 = vector.broadcast %cst_10 : f32 to vector<256x128xf32>
      %c0_11 = arith.constant 0 : index
      %c0_12 = arith.constant 0 : index
      %13 = vector.load %arg7[%c0_11, %c0_12] : memref<256x128xf32, #tpu.memory_space<vmem>>, vector<256x128xf32>
      tpu.vector_store %arg7[%c0_11, %c0_12], %12 {strides = array<i32>} : memref<256x128xf32, #tpu.memory_space<vmem>>, vector<256x128xf32>,
    } else {
    }
    %c0 = arith.constant 0 : index
    %c0_1 = arith.constant 0 : index
    %3 = vector.load %arg7[%c0, %c0_1] : memref<256x128xf32, #tpu.memory_space<vmem>>, vector<256x128xf32>
    %c0_2 = arith.constant 0 : index
    %c0_3 = arith.constant 0 : index
    %4 = vector.load %arg3[%c0_2, %c0_3] : memref<256x128xbf16, #tpu.memory_space<vmem>>, vector<256x128xbf16>
    %c0_4 = arith.constant 0 : index
    %c0_5 = arith.constant 0 : index
    %5 = vector.load %arg4[%c0_4, %c0_5] : memref<128x128xbf16, #tpu.memory_space<vmem>>, vector<128x128xbf16>
    %cst = arith.constant dense<0.000000e+00> : vector<256x128xf32>
    %6 = tpu.matmul %4, %5, %cst {dimension_numbers = #tpu.dot_dimension_numbers<[1], [0], [0], [1], [0, 0, 1, 1], [], []>} : vector<256x128xbf16>, vector<128x128xbf16>, vector<256x128xf32> -> vector<256x128xf32>
    %7 = arith.addf %3, %6 : vector<256x128xf32>
    %c0_6 = arith.constant 0 : index
    %c0_7 = arith.constant 0 : index
    %8 = vector.load %arg7[%c0_6, %c0_7] : memref<256x128xf32, #tpu.memory_space<vmem>>, vector<256x128xf32>
    tpu.vector_store %arg7[%c0_6, %c0_7], %7 {strides = array<i32>} : memref<256x128xf32, #tpu.memory_space<vmem>>, vector<256x128xf32>,
    %c0_i32_8 = arith.constant 0 : i32
    %9 = arith.cmpi eq, %arg2, %c0_i32_8 : i32
    %10 = arith.extui %9 : i1 to i32
    %c0_i32_9 = arith.constant 0 : i32
    %11 = arith.cmpi ne, %10, %c0_i32_9 : i32
    scf.if %11 {
      %c0_10 = arith.constant 0 : index
      %c0_11 = arith.constant 0 : index
      %12 = vector.load %arg7[%c0_10, %c0_11] : memref<256x128xf32, #tpu.memory_space<vmem>>, vector<256x128xf32>
      %c0_12 = arith.constant 0 : index
      %c0_13 = arith.constant 0 : index
      %13 = vector.load %arg5[%c0_12, %c0_13] : memref<1x128xf32, #tpu.memory_space<vmem>>, vector<1x128xf32>
      %14 = vector.broadcast %13 : vector<1x128xf32> to vector<256x128xf32>
      %15 = arith.addf %12, %14 : vector<256x128xf32>
      %16 = arith.truncf %15 : vector<256x128xf32> to vector<256x128xbf16>
      %c0_14 = arith.constant 0 : index
      %c0_15 = arith.constant 0 : index
      %17 = vector.load %arg6[%c0_14, %c0_15] : memref<256x128xbf16, #tpu.memory_space<vmem>>, vector<256x128xbf16>
      tpu.vector_store %arg6[%c0_14, %c0_15], %16 {strides = array<i32>} : memref<256x128xbf16, #tpu.memory_space<vmem>>, vector<256x128xbf16>,
    } else {
    }
    return
  }
  func.func @transform_0(%arg0: i32, %arg1: i32, %arg2: i32) -> (i32, i32) {
    %c0_i32 = arith.constant 0 : i32
    return %arg0, %arg2 : i32, i32
  }
  func.func @transform_1(%arg0: i32, %arg1: i32, %arg2: i32) -> (i32, i32) {
    %c0_i32 = arith.constant 0 : i32
    return %arg2, %arg1 : i32, i32
  }
  func.func @transform_2(%arg0: i32, %arg1: i32, %arg2: i32) -> (i32, i32) {
    %c0_i32 = arith.constant 0 : i32
    %c0_i32_0 = arith.constant 0 : i32
    return %c0_i32, %arg1 : i32, i32
  }
  func.func @transform_3(%arg0: i32, %arg1: i32, %arg2: i32) -> (i32, i32) {
    %c0_i32 = arith.constant 0 : i32
    return %arg0, %arg1 : i32, i32
  }
}

</mosaic_0001>

<llo_original>
// kernel: rep_parallel_forward.1
$region0: #{rep_parallel_forward.1}
  #allocation0 [shape = 'u32[]', space=smem, size = 0x4, offset = 0x4, fixed_abs, tag = 'smem constant byte address 0x4 - core index']
  #allocation1 [shape = 'u32[144,128]{1,0:T(1,128)}', space=vmem, size = 0x12000, scoped, tag = 'internal scratch']
  #allocation2 [shape = 'f32[256,128]{1,0:T(8,128)}', space=vmem, size = 0x20000, scoped, tag = 'scratch operand']
  %s0 = inlined_call_operand.vmem [shape: bf16[512,128], index: 0, kind: input, shape index: {}]
  %s1 = inlined_call_operand.vmem [shape: bf16[128,128], index: 1, kind: input, shape index: {}]
  %s2 = inlined_call_operand.vmem [shape: f32[1,128], index: 2, kind: input, shape index: {}]
  %s3 = inlined_call_operand.vmem [shape: bf16[512,128], index: 3, kind: output, shape index: {}]
  %s4 = sld [smem:[#allocation0]]
  $region53: #{rep_parallel_forward.1} parent=0
    _
  %s6 = ssub.s32 1, %s4
  %s7 = scalar_select 0, %s6, %s4
  loop: start=0, step=1, limit=4
  $region2: #{rep_parallel_forward.1} parent=0 // loop_pre_header
    _
  $region3: #{rep_parallel_forward.1} parent=0 // loop_header
    %s9 = sphi 0, %s13
    %p10 = scmp.ge.s32.totalorder %s9, 4
    %s16 = sphi 0, %s35
    %s17 = sphi 0, %s31
    %s18 = sphi 0, %s27
    %s19 = sphi 0, %s16
    %s20 = sphi 0, %s17
    %s21 = sphi 0, %s18
    %s22 = sphi 0, %s19
    %s23 = sphi 0, %s20
    %s24 = sphi 0, %s21
    %s40 = sphi 0, %s42
    %s43 = sphi 0, %s40
    %s44 = sphi 0, %s43
    %s60 = sphi 0, %s44
    %s68 = sphi 0, %s70
    %s71 = sphi 0, %s68
    %s72 = sphi 0, %s71
    %s88 = sphi 0, %s72
    %s94 = sphi 0, %s96
    %s97 = sphi 0, %s94
    %s98 = sphi 0, %s97
    %s114 = sphi 0, %s98
    %s122 = sphi 0, %s124
    %s125 = sphi 0, %s122
    %s126 = sphi 0, %s125
    %s142 = sphi 0, %s126
  $region4: #{rep_parallel_forward.1} parent=0 // loop_header_branch
    %12 = sbr.rel (%p10) target = $region8
  $region5: #{rep_parallel_forward.1} parent=0 // loop_body
    %s14 = ssub.s32 %s9, 1
    %s15 = ssub.s32 %s9, 2
    %s25 = sadd.s32 1, %s18
    %p26 = scmp.ge.s32.totalorder %s25, 1
    %s27 = scalar_select %p26, 0, %s25
    %s28 = sadd.s32 1, %s17
    %s29 = scalar_select %p26, %s28, %s17
    %p30 = scmp.ge.s32.totalorder %s29, 1
    %s31 = scalar_select %p30, 0, %s29
    %s32 = sadd.s32 1, %s16
    %s33 = scalar_select %p30, %s32, %s16
    %p34 = scmp.ge.s32.totalorder %s33, 2
    %s35 = scalar_select %p34, 0, %s33
    %s36 = ssub.s32 %s16, %s35
    %s37 = ssub.s32 %s18, %s27
    %s38 = sor.u32 %s36, %s37
    %p39 = scmp.eq.s32.totalorder %s38, 0
    %s41 = sadd.s32 %s40, 1
    %s42 = scalar_select %p39, %s40, %s41
    %p45 = pneg %p39
    %p46 = scmp.eq.s32.totalorder %s9, 1
    %p47 = por %p45, %p46
    %p48 = scmp.ne.s32.totalorder %s40, %s43
    %p49 = scmp.eq.s32.totalorder %s9, 0
    %p50 = por %p48, %p49
    %p51 = scmp.ne.s32.totalorder %s40, %s43
    %p52 = scmp.eq.s32.totalorder %s14, 1
    %p53 = por %p51, %p52
    %p54 = scmp.ne.s32.totalorder %s43, %s44
    %p55 = scmp.eq.s32.totalorder %s14, 0
    %p56 = por %p54, %p55
    %p57 = scmp.ne.s32.totalorder %s43, %s44
    %p58 = scmp.eq.s32.totalorder %s15, 1
    %p59 = por %p57, %p58
    %p61 = scmp.ne.s32.totalorder %s44, %s60
    %p62 = scmp.eq.s32.totalorder %s15, 0
    %p63 = por %p61, %p62
    %s64 = ssub.s32 %s18, %s27
    %s65 = ssub.s32 %s17, %s31
    %s66 = sor.u32 %s64, %s65
    %p67 = scmp.eq.s32.totalorder %s66, 0
    %s69 = sadd.s32 %s68, 1
    %s70 = scalar_select %p67, %s68, %s69
    %p73 = pneg %p67
    %p74 = scmp.eq.s32.totalorder %s9, 1
    %p75 = por %p73, %p74
    %p76 = scmp.ne.s32.totalorder %s68, %s71
    %p77 = scmp.eq.s32.totalorder %s9, 0
    %p78 = por %p76, %p77
    %p79 = scmp.ne.s32.totalorder %s68, %s71
    %p80 = scmp.eq.s32.totalorder %s14, 1
    %p81 = por %p79, %p80
    %p82 = scmp.ne.s32.totalorder %s71, %s72
    %p83 = scmp.eq.s32.totalorder %s14, 0
    %p84 = por %p82, %p83
    %p85 = scmp.ne.s32.totalorder %s71, %s72
    %p86 = scmp.eq.s32.totalorder %s15, 1
    %p87 = por %p85, %p86
    %p89 = scmp.ne.s32.totalorder %s72, %s88
    %p90 = scmp.eq.s32.totalorder %s15, 0
    %p91 = por %p89, %p90
    %s92 = ssub.s32 %s17, %s31
    %p93 = scmp.eq.s32.totalorder %s92, 0
    %s95 = sadd.s32 %s94, 1
    %s96 = scalar_select %p93, %s94, %s95
    %p99 = pneg %p93
    %p100 = scmp.eq.s32.totalorder %s9, 1
    %p101 = por %p99, %p100
    %p102 = scmp.ne.s32.totalorder %s94, %s97
    %p103 = scmp.eq.s32.totalorder %s9, 0
    %p104 = por %p102, %p103
    %p105 = scmp.ne.s32.totalorder %s94, %s97
    %p106 = scmp.eq.s32.totalorder %s14, 1
    %p107 = por %p105, %p106
    %p108 = scmp.ne.s32.totalorder %s97, %s98
    %p109 = scmp.eq.s32.totalorder %s14, 0
    %p110 = por %p108, %p109
    %p111 = scmp.ne.s32.totalorder %s97, %s98
    %p112 = scmp.eq.s32.totalorder %s15, 1
    %p113 = por %p111, %p112
    %p115 = scmp.ne.s32.totalorder %s98, %s114
    %p116 = scmp.eq.s32.totalorder %s15, 0
    %p117 = por %p115, %p116
    %s118 = ssub.s32 %s16, %s35
    %s119 = ssub.s32 %s17, %s31
    %s120 = sor.u32 %s118, %s119
    %p121 = scmp.eq.s32.totalorder %s120, 0
    %s123 = sadd.s32 %s122, 1
    %s124 = scalar_select %p121, %s122, %s123
    %p127 = pneg %p121
    %p128 = scmp.eq.s32.totalorder %s9, 1
    %p129 = por %p127, %p128
    %p130 = scmp.ne.s32.totalorder %s122, %s125
    %p131 = scmp.eq.s32.totalorder %s9, 0
    %p132 = por %p130, %p131
    %p133 = scmp.ne.s32.totalorder %s122, %s125
    %p134 = scmp.eq.s32.totalorder %s14, 1
    %p135 = por %p133, %p134
    %p136 = scmp.ne.s32.totalorder %s125, %s126
    %p137 = scmp.eq.s32.totalorder %s14, 0
    %p138 = por %p136, %p137
    %p139 = scmp.ne.s32.totalorder %s125, %s126
    %p140 = scmp.eq.s32.totalorder %s15, 1
    %p141 = por %p139, %p140
    %p143 = scmp.ne.s32.totalorder %s126, %s142
    %p144 = scmp.eq.s32.totalorder %s15, 0
    %p145 = por %p143, %p144
    %p146 = scmp.le.s32.totalorder 1, %s9
    %p147 = scmp.lt.s32.totalorder %s9, 3
    %p148 = pnand %p146, %p147
    %p149 = pneg %p148
    // Predicated region
    $region9: #{rep_parallel_forward.1} parent=5 // pred_check
      _
    $region10: #{rep_parallel_forward.1} parent=5 // pred_check_branch
      %151 = sbr.rel (%p148) target = $region12
    $region11: #{rep_parallel_forward.1} parent=5 // pred_region
      %s152 = ssub.s32 %s9, 1
      // Predicated region
      $region13: #{rep_parallel_forward.1} parent=11 // pred_check
        %p153 = pneg %p84
      $region14: #{rep_parallel_forward.1} parent=11 // pred_check_branch
        %155 = sbr.rel (%p153) target = $region16
      $region15: #{rep_parallel_forward.1} parent=11 // pred_region
        %s156 = smul.u32 16, %s21
        %p157 = scmp.lt.s32.totalorder %s156, 15
        %s158 = scalar_select %p157, %s156, 15
        %p159 = scmp.lt.s32.totalorder %s20, 0
        %s160 = scalar_select %p159, %s20, 0
        %s161 = sadd.s32 %s160, %s158
        %s162 = smul.addr %s161, 4
        %s163 = scalar_lea.vmem %s1, %s162
        %s164 = smul.u32 16, %s21
      $region16: #{rep_parallel_forward.1} parent=11 // pred_fallthru
        _
      // Predicated region
      $region17: #{rep_parallel_forward.1} parent=11 // pred_check
        %p165 = pneg %p110
      $region18: #{rep_parallel_forward.1} parent=11 // pred_check_branch
        %167 = sbr.rel (%p165) target = $region20
      $region19: #{rep_parallel_forward.1} parent=11 // pred_region
        %p168 = scmp.lt.s32.totalorder %s20, 0
        %s169 = scalar_select %p168, %s20, 0
        %s170 = scalar_lea.vmem %s2, %s169
      $region20: #{rep_parallel_forward.1} parent=11 // pred_fallthru
        _
    $region12: #{rep_parallel_forward.1} parent=5 // pred_fallthru
      _
    %p171 = scmp.lt.s32.totalorder %s9, 2
    // Predicated region
    $region21: #{rep_parallel_forward.1} parent=5 // pred_check
      %p172 = pneg %p171
    $region22: #{rep_parallel_forward.1} parent=5 // pred_check_branch
      %174 = sbr.rel (%p172) target = $region24
    $region23: #{rep_parallel_forward.1} parent=5 // pred_region
      // Predicated region
      $region25: #{rep_parallel_forward.1} parent=23 // pred_check
        %p175 = pneg %p50
      $region26: #{rep_parallel_forward.1} parent=23 // pred_check_branch
        %177 = sbr.rel (%p175) target = $region28
      $region27: #{rep_parallel_forward.1} parent=23 // pred_region
        %s178 = smul.u32 32, %s16
        %p179 = scmp.lt.s32.totalorder %s178, 63
        %s180 = scalar_select %p179, %s178, 63
        %p181 = scmp.lt.s32.totalorder %s18, 0
        %s182 = scalar_select %p181, %s18, 0
        %s183 = sadd.s32 %s182, %s180
        %s184 = smul.addr %s183, 4
        %s185 = scalar_lea.vmem %s0, %s184
        %s186 = smul.u32 32, %s16
      $region28: #{rep_parallel_forward.1} parent=23 // pred_fallthru
        _
    $region24: #{rep_parallel_forward.1} parent=5 // pred_fallthru
      _
    %p187 = scmp.le.s32.totalorder 1, %s9
    %p188 = scmp.lt.s32.totalorder %s9, 3
    %p189 = pnand %p187, %p188
    %p190 = pneg %p189
    // Predicated region
    $region29: #{rep_parallel_forward.1} parent=5 // pred_check
      _
    $region30: #{rep_parallel_forward.1} parent=5 // pred_check_branch
      %192 = sbr.rel (%p189) target = $region32
    $region31: #{rep_parallel_forward.1} parent=5 // pred_region
      %s193 = ssub.s32 %s9, 1
      %s194 = smul.u32 32, %s19
      %p195 = scmp.lt.s32.totalorder %s194, 63
      %s196 = scalar_select %p195, %s194, 63
      %p197 = scmp.lt.s32.totalorder %s21, 0
      %s198 = scalar_select %p197, %s21, 0
      %s199 = sadd.s32 %s198, %s196
      %s200 = smul.addr %s199, 4
      %s201 = scalar_lea.vmem %s0, %s200
      %p202 = pneg %p56
      %p203 = pneg %p53
      %s204 = smul.u32 16, %s21
      %p205 = scmp.lt.s32.totalorder %s204, 15
      %s206 = scalar_select %p205, %s204, 15
      %p207 = scmp.lt.s32.totalorder %s20, 0
      %s208 = scalar_select %p207, %s20, 0
      %s209 = sadd.s32 %s208, %s206
      %s210 = smul.addr %s209, 4
      %s211 = scalar_lea.vmem %s1, %s210
      %p212 = pneg %p84
      %p213 = pneg %p81
      %p214 = scmp.lt.s32.totalorder %s20, 0
      %s215 = scalar_select %p214, %s20, 0
      %s216 = scalar_lea.vmem %s2, %s215
      %p217 = pneg %p110
      %p218 = pneg %p107
      %p219 = pneg %p138
      %p220 = pneg %p135
      %s221 = smul.u32 32, %s19
      %p222 = scmp.lt.s32.totalorder %s221, 63
      %s223 = scalar_select %p222, %s221, 63
      %p224 = scmp.lt.s32.totalorder %s20, 0
      %s225 = scalar_select %p224, %s20, 0
      %s226 = sadd.s32 %s225, %s223
      %s227 = smul.addr %s226, 4
      %s228 = scalar_lea.vmem %s3, %s227
      %s229 = smul.u32 32, %s19
      %p230 = scmp.lt.s32.totalorder %s229, 63
      %s231 = scalar_select %p230, %s229, 63
      %p232 = scmp.lt.s32.totalorder %s21, 0
      %s233 = scalar_select %p232, %s21, 0
      %s234 = sadd.s32 %s233, %s231
      %s235 = smul.addr %s234, 4
      %s236 = scalar_lea.vmem %s0, %s235
      %s237 = smul.u32 32, %s19
      %s238 = smul.u32 16, %s21
      %p239 = scmp.lt.s32.totalorder %s238, 15
      %s240 = scalar_select %p239, %s238, 15
      %p241 = scmp.lt.s32.totalorder %s20, 0
      %s242 = scalar_select %p241, %s20, 0
      %s243 = sadd.s32 %s242, %s240
      %s244 = smul.addr %s243, 4
      %s245 = scalar_lea.vmem %s1, %s244
      %s246 = smul.u32 16, %s21
      %p247 = scmp.lt.s32.totalorder %s20, 0
      %s248 = scalar_select %p247, %s20, 0
      %s249 = scalar_lea.vmem %s2, %s248
      %s250 = smul.u32 32, %s19
      %p251 = scmp.lt.s32.totalorder %s250, 63
      %s252 = scalar_select %p251, %s250, 63
      %p253 = scmp.lt.s32.totalorder %s20, 0
      %s254 = scalar_select %p253, %s20, 0
      %s255 = sadd.s32 %s254, %s252
      %s256 = smul.addr %s255, 4
      %s257 = scalar_lea.vmem %s3, %s256
      %s258 = smul.u32 32, %s19
      %p260 = scmp.eq.s32.totalorder %s21, 0
      // Predicated region
      $region33: #{rep_parallel_forward.1} parent=31 // pred_check
        %p261 = pneg %p260
      $region34: #{rep_parallel_forward.1} parent=31 // pred_check_branch
        %263 = sbr.rel (%p261) target = $region36
      $region35: #{rep_parallel_forward.1} parent=31 // pred_region
        %264 = vst [vmem:[#allocation2] sm:$0xff] 0.0
        %265 = vst [vmem:[#allocation2 + $0x8] sm:$0xff] 0.0
        %266 = vst [vmem:[#allocation2 + $0x10] sm:$0xff] 0.0
        %267 = vst [vmem:[#allocation2 + $0x18] sm:$0xff] 0.0
        %268 = vst [vmem:[#allocation2 + $0x20] sm:$0xff] 0.0
        %269 = vst [vmem:[#allocation2 + $0x28] sm:$0xff] 0.0
        %270 = vst [vmem:[#allocation2 + $0x30] sm:$0xff] 0.0
        %271 = vst [vmem:[#allocation2 + $0x38] sm:$0xff] 0.0
        %272 = vst [vmem:[#allocation2 + $0x40] sm:$0xff] 0.0
        %273 = vst [vmem:[#allocation2 + $0x48] sm:$0xff] 0.0
        %274 = vst [vmem:[#allocation2 + $0x50] sm:$0xff] 0.0
        %275 = vst [vmem:[#allocation2 + $0x58] sm:$0xff] 0.0
        %276 = vst [vmem:[#allocation2 + $0x60] sm:$0xff] 0.0
        %277 = vst [vmem:[#allocation2 + $0x68] sm:$0xff] 0.0
        %278 = vst [vmem:[#allocation2 + $0x70] sm:$0xff] 0.0
        %279 = vst [vmem:[#allocation2 + $0x78] sm:$0xff] 0.0
        %280 = vst [vmem:[#allocation2 + $0x80] sm:$0xff] 0.0
        %281 = vst [vmem:[#allocation2 + $0x88] sm:$0xff] 0.0
        %282 = vst [vmem:[#allocation2 + $0x90] sm:$0xff] 0.0
        %283 = vst [vmem:[#allocation2 + $0x98] sm:$0xff] 0.0
        %284 = vst [vmem:[#allocation2 + $0xa0] sm:$0xff] 0.0
        %285 = vst [vmem:[#allocation2 + $0xa8] sm:$0xff] 0.0
        %286 = vst [vmem:[#allocation2 + $0xb0] sm:$0xff] 0.0
        %287 = vst [vmem:[#allocation2 + $0xb8] sm:$0xff] 0.0
        %288 = vst [vmem:[#allocation2 + $0xc0] sm:$0xff] 0.0
        %289 = vst [vmem:[#allocation2 + $0xc8] sm:$0xff] 0.0
        %290 = vst [vmem:[#allocation2 + $0xd0] sm:$0xff] 0.0
        %291 = vst [vmem:[#allocation2 + $0xd8] sm:$0xff] 0.0
        %292 = vst [vmem:[#allocation2 + $0xe0] sm:$0xff] 0.0
        %293 = vst [vmem:[#allocation2 + $0xe8] sm:$0xff] 0.0
        %294 = vst [vmem:[#allocation2 + $0xf0] sm:$0xff] 0.0
        %295 = vst [vmem:[#allocation2 + $0xf8] sm:$0xff] 0.0
      $region36: #{rep_parallel_forward.1} parent=31 // pred_fallthru
        _
      %v296 = vld [vmem:[#allocation2] sm:$0xff]
      %v297 = vld [vmem:[#allocation2 + $0x8] sm:$0xff]
      %v298 = vld [vmem:[#allocation2 + $0x10] sm:$0xff]
      %v299 = vld [vmem:[#allocation2 + $0x18] sm:$0xff]
      %v300 = vld [vmem:[#allocation2 + $0x20] sm:$0xff]
      %v301 = vld [vmem:[#allocation2 + $0x28] sm:$0xff]
      %v302 = vld [vmem:[#allocation2 + $0x30] sm:$0xff]
      %v303 = vld [vmem:[#allocation2 + $0x38] sm:$0xff]
      %v304 = vld [vmem:[#allocation2 + $0x40] sm:$0xff]
      %v305 = vld [vmem:[#allocation2 + $0x48] sm:$0xff]
      %v306 = vld [vmem:[#allocation2 + $0x50] sm:$0xff]
      %v307 = vld [vmem:[#allocation2 + $0x58] sm:$0xff]
      %v308 = vld [vmem:[#allocation2 + $0x60] sm:$0xff]
      %v309 = vld [vmem:[#allocation2 + $0x68] sm:$0xff]
      %v310 = vld [vmem:[#allocation2 + $0x70] sm:$0xff]
      %v311 = vld [vmem:[#allocation2 + $0x78] sm:$0xff]
      %v312 = vld [vmem:[#allocation2 + $0x80] sm:$0xff]
      %v313 = vld [vmem:[#allocation2 + $0x88] sm:$0xff]
      %v314 = vld [vmem:[#allocation2 + $0x90] sm:$0xff]
      %v315 = vld [vmem:[#allocation2 + $0x98] sm:$0xff]
      %v316 = vld [vmem:[#allocation2 + $0xa0] sm:$0xff]
      %v317 = vld [vmem:[#allocation2 + $0xa8] sm:$0xff]
      %v318 = vld [vmem:[#allocation2 + $0xb0] sm:$0xff]
      %v319 = vld [vmem:[#allocation2 + $0xb8] sm:$0xff]
      %v320 = vld [vmem:[#allocation2 + $0xc0] sm:$0xff]
      %v321 = vld [vmem:[#allocation2 + $0xc8] sm:$0xff]
      %v322 = vld [vmem:[#allocation2 + $0xd0] sm:$0xff]
      %v323 = vld [vmem:[#allocation2 + $0xd8] sm:$0xff]
      %v324 = vld [vmem:[#allocation2 + $0xe0] sm:$0xff]
      %v325 = vld [vmem:[#allocation2 + $0xe8] sm:$0xff]
      %v326 = vld [vmem:[#allocation2 + $0xf0] sm:$0xff]
      %v327 = vld [vmem:[#allocation2 + $0xf8] sm:$0xff]
      %v328 = vld [vmem:[%s236] sm:$0xf]
      %v329 = vld [vmem:[%s236 + $0x4] sm:$0xf]
      %v330 = vld [vmem:[%s236 + $0x8] sm:$0xf]
      %v331 = vld [vmem:[%s236 + $0xc] sm:$0xf]
      %v332 = vld [vmem:[%s236 + $0x10] sm:$0xf]
      %v333 = vld [vmem:[%s236 + $0x14] sm:$0xf]
      %v334 = vld [vmem:[%s236 + $0x18] sm:$0xf]
      %v335 = vld [vmem:[%s236 + $0x1c] sm:$0xf]
      %v336 = vld [vmem:[%s236 + $0x20] sm:$0xf]
      %v337 = vld [vmem:[%s236 + $0x24] sm:$0xf]
      %v338 = vld [vmem:[%s236 + $0x28] sm:$0xf]
      %v339 = vld [vmem:[%s236 + $0x2c] sm:$0xf]
      %v340 = vld [vmem:[%s236 + $0x30] sm:$0xf]
      %v341 = vld [vmem:[%s236 + $0x34] sm:$0xf]
      %v342 = vld [vmem:[%s236 + $0x38] sm:$0xf]
      %v343 = vld [vmem:[%s236 + $0x3c] sm:$0xf]
      %v344 = vld [vmem:[%s236 + $0x40] sm:$0xf]
      %v345 = vld [vmem:[%s236 + $0x44] sm:$0xf]
      %v346 = vld [vmem:[%s236 + $0x48] sm:$0xf]
      %v347 = vld [vmem:[%s236 + $0x4c] sm:$0xf]
      %v348 = vld [vmem:[%s236 + $0x50] sm:$0xf]
      %v349 = vld [vmem:[%s236 + $0x54] sm:$0xf]
      %v350 = vld [vmem:[%s236 + $0x58] sm:$0xf]
      %v351 = vld [vmem:[%s236 + $0x5c] sm:$0xf]
      %v352 = vld [vmem:[%s236 + $0x60] sm:$0xf]
      %v353 = vld [vmem:[%s236 + $0x64] sm:$0xf]
      %v354 = vld [vmem:[%s236 + $0x68] sm:$0xf]
      %v355 = vld [vmem:[%s236 + $0x6c] sm:$0xf]
      %v356 = vld [vmem:[%s236 + $0x70] sm:$0xf]
      %v357 = vld [vmem:[%s236 + $0x74] sm:$0xf]
      %v358 = vld [vmem:[%s236 + $0x78] sm:$0xf]
      %v359 = vld [vmem:[%s236 + $0x7c] sm:$0xf]
      %v360 = vld [vmem:[%s245] sm:$0xf]
      %v361 = vld [vmem:[%s245 + $0x4] sm:$0xf]
      %v362 = vld [vmem:[%s245 + $0x8] sm:$0xf]
      %v363 = vld [vmem:[%s245 + $0xc] sm:$0xf]
      %v364 = vld [vmem:[%s245 + $0x10] sm:$0xf]
      %v365 = vld [vmem:[%s245 + $0x14] sm:$0xf]
      %v366 = vld [vmem:[%s245 + $0x18] sm:$0xf]
      %v367 = vld [vmem:[%s245 + $0x1c] sm:$0xf]
      %v368 = vld [vmem:[%s245 + $0x20] sm:$0xf]
      %v369 = vld [vmem:[%s245 + $0x24] sm:$0xf]
      %v370 = vld [vmem:[%s245 + $0x28] sm:$0xf]
      %v371 = vld [vmem:[%s245 + $0x2c] sm:$0xf]
      %v372 = vld [vmem:[%s245 + $0x30] sm:$0xf]
      %v373 = vld [vmem:[%s245 + $0x34] sm:$0xf]
      %v374 = vld [vmem:[%s245 + $0x38] sm:$0xf]
      %v375 = vld [vmem:[%s245 + $0x3c] sm:$0xf]
      %v408 = vunpack.c.l.b16 %v328
      %v409 = vunpack.c.l.b16 %v329
      %v410 = vunpack.c.l.b16 %v330
      %v411 = vunpack.c.l.b16 %v331
      %v412 = vunpack.c.l.b16 %v332
      %v413 = vunpack.c.l.b16 %v333
      %v414 = vunpack.c.l.b16 %v334
      %v415 = vunpack.c.l.b16 %v335
      %v416 = vunpack.c.l.b16 %v336
      %v417 = vunpack.c.l.b16 %v337
      %v418 = vunpack.c.l.b16 %v338
      %v419 = vunpack.c.l.b16 %v339
      %v420 = vunpack.c.l.b16 %v340
      %v421 = vunpack.c.l.b16 %v341
      %v422 = vunpack.c.l.b16 %v342
      %v423 = vunpack.c.l.b16 %v343
      %v424 = vunpack.c.l.b16 %v344
      %v425 = vunpack.c.l.b16 %v345
      %v426 = vunpack.c.l.b16 %v346
      %v427 = vunpack.c.l.b16 %v347
      %v428 = vunpack.c.l.b16 %v348
      %v429 = vunpack.c.l.b16 %v349
      %v430 = vunpack.c.l.b16 %v350
      %v431 = vunpack.c.l.b16 %v351
      %v432 = vunpack.c.l.b16 %v352
      %v433 = vunpack.c.l.b16 %v353
      %v434 = vunpack.c.l.b16 %v354
      %v435 = vunpack.c.l.b16 %v355
      %v436 = vunpack.c.l.b16 %v356
      %v437 = vunpack.c.l.b16 %v357
      %v438 = vunpack.c.l.b16 %v358
      %v439 = vunpack.c.l.b16 %v359
      %v440 = vpack.c.b16 %v409, %v408
      %v441 = vpack.c.b16 %v411, %v410
      %v442 = vpack.c.b16 %v413, %v412
      %v443 = vpack.c.b16 %v415, %v414
      %v444 = vpack.c.b16 %v417, %v416
      %v445 = vpack.c.b16 %v419, %v418
      %v446 = vpack.c.b16 %v421, %v420
      %v447 = vpack.c.b16 %v423, %v422
      %v448 = vpack.c.b16 %v425, %v424
      %v449 = vpack.c.b16 %v427, %v426
      %v450 = vpack.c.b16 %v429, %v428
      %v451 = vpack.c.b16 %v431, %v430
      %v452 = vpack.c.b16 %v433, %v432
      %v453 = vpack.c.b16 %v435, %v434
      %v454 = vpack.c.b16 %v437, %v436
      %v455 = vpack.c.b16 %v439, %v438
      %v488 = vunpack.c.l.b16 %v360
      %v489 = vunpack.c.l.b16 %v361
      %v490 = vunpack.c.l.b16 %v362
      %v491 = vunpack.c.l.b16 %v363
      %v492 = vunpack.c.l.b16 %v364
      %v493 = vunpack.c.l.b16 %v365
      %v494 = vunpack.c.l.b16 %v366
      %v495 = vunpack.c.l.b16 %v367
      %v496 = vunpack.c.l.b16 %v368
      %v497 = vunpack.c.l.b16 %v369
      %v498 = vunpack.c.l.b16 %v370
      %v499 = vunpack.c.l.b16 %v371
      %v500 = vunpack.c.l.b16 %v372
      %v501 = vunpack.c.l.b16 %v373
      %v502 = vunpack.c.l.b16 %v374
      %v503 = vunpack.c.l.b16 %v375
      %v504 = vpack.c.b16 %v489, %v488
      %v505 = vpack.c.b16 %v491, %v490
      %v506 = vpack.c.b16 %v493, %v492
      %v507 = vpack.c.b16 %v495, %v494
      %v508 = vpack.c.b16 %v497, %v496
      %v509 = vpack.c.b16 %v499, %v498
      %v510 = vpack.c.b16 %v501, %v500
      %v511 = vpack.c.b16 %v503, %v502
      %520 = vmatprep.subr.bf16.mxu0 0
      %521 = vmatpush1.bf16.msra.mxu0 %v504
      %522 = vmatprep.subr.bf16.mxu0 0
      %523 = vmatpush1.bf16.msra.mxu0 %v505
      %524 = vmatprep.subr.bf16.mxu0 0
      %525 = vmatpush1.bf16.msra.mxu0 %v506
      %526 = vmatprep.subr.bf16.mxu0 0
      %527 = vmatpush1.bf16.msra.mxu0 %v507
      %528 = vmatprep.subr.bf16.mxu0 0
      %529 = vmatpush1.bf16.msra.mxu0 %v508
      %530 = vmatprep.subr.bf16.mxu0 0
      %531 = vmatpush1.bf16.msra.mxu0 %v509
      %532 = vmatprep.subr.bf16.mxu0 0
      %533 = vmatpush1.bf16.msra.mxu0 %v510
      %534 = vmatprep.subr.bf16.mxu0 0
      %535 = vmatpush1.bf16.msra.mxu0 %v511
      %536 = vmatprep.subr.bf16.mxu0 0
      %537 = vmatpush1.bf16.msra.mxu0 0
      %538 = vmatprep.subr.bf16.mxu0 0
      %539 = vmatpush1.bf16.msra.mxu0 0
      %540 = vmatprep.subr.bf16.mxu0 0
      %541 = vmatpush1.bf16.msra.mxu0 0
      %542 = vmatprep.subr.bf16.mxu0 0
      %543 = vmatpush1.bf16.msra.mxu0 0
      %544 = vmatprep.subr.bf16.mxu0 0
      %545 = vmatpush1.bf16.msra.mxu0 0
      %546 = vmatprep.subr.bf16.mxu0 0
      %547 = vmatpush1.bf16.msra.mxu0 0
      %548 = vmatprep.subr.bf16.mxu0 0
      %549 = vmatpush1.bf16.msra.mxu0 0
      %550 = vmatprep.subr.bf16.mxu0 0
      %551 = vmatpush1.bf16.msra.mxu0 0
      %552 = vmatprep.mubr.bf16.mxu0 0
      %553 = vmatmul.mubr.bf16.gmra.mrb[0].mxu0 %v440
      %v554 = vpop.f32.mrb[0].mxu0
      %v555 = vadd.f32 0.0, %v554
      %v556 = vpop.f32.mrb[0].mxu0
      %v557 = vpop.f32.mrb[0].mxu0
      %v558 = vadd.f32 0.0, %v557
      %v559 = vpop.f32.mrb[0].mxu0
      %560 = vmatprep.mubr.bf16.mxu0 0
      %561 = vmatmul.mubr.bf16.gmra.mrb[0].mxu0 %v441
      %v562 = vpop.f32.mrb[0].mxu0
      %v563 = vadd.f32 0.0, %v562
      %v564 = vpop.f32.mrb[0].mxu0
      %v565 = vpop.f32.mrb[0].mxu0
      %v566 = vadd.f32 0.0, %v565
      %v567 = vpop.f32.mrb[0].mxu0
      %568 = vmatprep.mubr.bf16.mxu0 0
      %569 = vmatmul.mubr.bf16.gmra.mrb[0].mxu0 %v442
      %v570 = vpop.f32.mrb[0].mxu0
      %v571 = vadd.f32 0.0, %v570
      %v572 = vpop.f32.mrb[0].mxu0
      %v573 = vpop.f32.mrb[0].mxu0
      %v574 = vadd.f32 0.0, %v573
      %v575 = vpop.f32.mrb[0].mxu0
      %576 = vmatprep.mubr.bf16.mxu0 0
      %577 = vmatmul.mubr.bf16.gmra.mrb[0].mxu0 %v443
      %v578 = vpop.f32.mrb[0].mxu0
      %v579 = vadd.f32 0.0, %v578
      %v580 = vpop.f32.mrb[0].mxu0
      %v581 = vpop.f32.mrb[0].mxu0
      %v582 = vadd.f32 0.0, %v581
      %v583 = vpop.f32.mrb[0].mxu0
      %584 = vmatprep.mubr.bf16.mxu0 0
      %585 = vmatmul.mubr.bf16.gmra.mrb[0].mxu0 %v444
      %v586 = vpop.f32.mrb[0].mxu0
      %v587 = vadd.f32 0.0, %v586
      %v588 = vpop.f32.mrb[0].mxu0
      %v589 = vpop.f32.mrb[0].mxu0
      %v590 = vadd.f32 0.0, %v589
      %v591 = vpop.f32.mrb[0].mxu0
      %592 = vmatprep.mubr.bf16.mxu0 0
      %593 = vmatmul.mubr.bf16.gmra.mrb[0].mxu0 %v445
      %v594 = vpop.f32.mrb[0].mxu0
      %v595 = vadd.f32 0.0, %v594
      %v596 = vpop.f32.mrb[0].mxu0
      %v597 = vpop.f32.mrb[0].mxu0
      %v598 = vadd.f32 0.0, %v597
      %v599 = vpop.f32.mrb[0].mxu0
      %600 = vmatprep.mubr.bf16.mxu0 0
      %601 = vmatmul.mubr.bf16.gmra.mrb[0].mxu0 %v446
      %v602 = vpop.f32.mrb[0].mxu0
      %v603 = vadd.f32 0.0, %v602
      %v604 = vpop.f32.mrb[0].mxu0
      %v605 = vpop.f32.mrb[0].mxu0
      %v606 = vadd.f32 0.0, %v605
      %v607 = vpop.f32.mrb[0].mxu0
      %608 = vmatprep.mubr.bf16.mxu0 0
      %609 = vmatmul.mubr.bf16.gmra.mrb[0].mxu0 %v447
      %v610 = vpop.f32.mrb[0].mxu0
      %v611 = vadd.f32 0.0, %v610
      %v612 = vpop.f32.mrb[0].mxu0
      %v613 = vpop.f32.mrb[0].mxu0
      %v614 = vadd.f32 0.0, %v613
      %v615 = vpop.f32.mrb[0].mxu0
      %616 = vmatprep.mubr.bf16.mxu0 0
      %617 = vmatmul.mubr.bf16.gmra.mrb[0].mxu0 %v448
      %v618 = vpop.f32.mrb[0].mxu0
      %v619 = vadd.f32 0.0, %v618
      %v620 = vpop.f32.mrb[0].mxu0
      %v621 = vpop.f32.mrb[0].mxu0
      %v622 = vadd.f32 0.0, %v621
      %v623 = vpop.f32.mrb[0].mxu0
      %624 = vmatprep.mubr.bf16.mxu0 0
      %625 = vmatmul.mubr.bf16.gmra.mrb[0].mxu0 %v449
      %v626 = vpop.f32.mrb[0].mxu0
      %v627 = vadd.f32 0.0, %v626
      %v628 = vpop.f32.mrb[0].mxu0
      %v629 = vpop.f32.mrb[0].mxu0
      %v630 = vadd.f32 0.0, %v629
      %v631 = vpop.f32.mrb[0].mxu0
      %632 = vmatprep.mubr.bf16.mxu0 0
      %633 = vmatmul.mubr.bf16.gmra.mrb[0].mxu0 %v450
      %v634 = vpop.f32.mrb[0].mxu0
      %v635 = vadd.f32 0.0, %v634
      %v636 = vpop.f32.mrb[0].mxu0
      %v637 = vpop.f32.mrb[0].mxu0
      %v638 = vadd.f32 0.0, %v637
      %v639 = vpop.f32.mrb[0].mxu0
      %640 = vmatprep.mubr.bf16.mxu0 0
      %641 = vmatmul.mubr.bf16.gmra.mrb[0].mxu0 %v451
      %v642 = vpop.f32.mrb[0].mxu0
      %v643 = vadd.f32 0.0, %v642
      %v644 = vpop.f32.mrb[0].mxu0
      %v645 = vpop.f32.mrb[0].mxu0
      %v646 = vadd.f32 0.0, %v645
      %v647 = vpop.f32.mrb[0].mxu0
      %648 = vmatprep.mubr.bf16.mxu0 0
      %649 = vmatmul.mubr.bf16.gmra.mrb[0].mxu0 %v452
      %v650 = vpop.f32.mrb[0].mxu0
      %v651 = vadd.f32 0.0, %v650
      %v652 = vpop.f32.mrb[0].mxu0
      %v653 = vpop.f32.mrb[0].mxu0
      %v654 = vadd.f32 0.0, %v653
      %v655 = vpop.f32.mrb[0].mxu0
      %656 = vmatprep.mubr.bf16.mxu0 0
      %657 = vmatmul.mubr.bf16.gmra.mrb[0].mxu0 %v453
      %v658 = vpop.f32.mrb[0].mxu0
      %v659 = vadd.f32 0.0, %v658
      %v660 = vpop.f32.mrb[0].mxu0
      %v661 = vpop.f32.mrb[0].mxu0
      %v662 = vadd.f32 0.0, %v661
      %v663 = vpop.f32.mrb[0].mxu0
      %664 = vmatprep.mubr.bf16.mxu0 0
      %665 = vmatmul.mubr.bf16.gmra.mrb[0].mxu0 %v454
      %v666 = vpop.f32.mrb[0].mxu0
      %v667 = vadd.f32 0.0, %v666
      %v668 = vpop.f32.mrb[0].mxu0
      %v669 = vpop.f32.mrb[0].mxu0
      %v670 = vadd.f32 0.0, %v669
      %v671 = vpop.f32.mrb[0].mxu0
      %672 = vmatprep.mubr.bf16.mxu0 0
      %673 = vmatmul.mubr.bf16.gmra.mrb[0].mxu0 %v455
      %v674 = vpop.f32.mrb[0].mxu0
      %v675 = vadd.f32 0.0, %v674
      %v676 = vpop.f32.mrb[0].mxu0
      %v677 = vpop.f32.mrb[0].mxu0
      %v678 = vadd.f32 0.0, %v677
      %v679 = vpop.f32.mrb[0].mxu0
      %680 = vdwg.mxu0
      %v681 = vadd.f32 %v296, %v555
      %v682 = vadd.f32 %v297, %v558
      %v683 = vadd.f32 %v298, %v563
      %v684 = vadd.f32 %v299, %v566
      %v685 = vadd.f32 %v300, %v571
      %v686 = vadd.f32 %v301, %v574
      %v687 = vadd.f32 %v302, %v579
      %v688 = vadd.f32 %v303, %v582
      %v689 = vadd.f32 %v304, %v587
      %v690 = vadd.f32 %v305, %v590
      %v691 = vadd.f32 %v306, %v595
      %v692 = vadd.f32 %v307, %v598
      %v693 = vadd.f32 %v308, %v603
      %v694 = vadd.f32 %v309, %v606
      %v695 = vadd.f32 %v310, %v611
      %v696 = vadd.f32 %v311, %v614
      %v697 = vadd.f32 %v312, %v619
      %v698 = vadd.f32 %v313, %v622
      %v699 = vadd.f32 %v314, %v627
      %v700 = vadd.f32 %v315, %v630
      %v701 = vadd.f32 %v316, %v635
      %v702 = vadd.f32 %v317, %v638
      %v703 = vadd.f32 %v318, %v643
      %v704 = vadd.f32 %v319, %v646
      %v705 = vadd.f32 %v320, %v651
      %v706 = vadd.f32 %v321, %v654
      %v707 = vadd.f32 %v322, %v659
      %v708 = vadd.f32 %v323, %v662
      %v709 = vadd.f32 %v324, %v667
      %v710 = vadd.f32 %v325, %v670
      %v711 = vadd.f32 %v326, %v675
      %v712 = vadd.f32 %v327, %v678
      %713 = vst [vmem:[#allocation2] sm:$0xff] %v681
      %714 = vst [vmem:[#allocation2 + $0x8] sm:$0xff] %v682
      %715 = vst [vmem:[#allocation2 + $0x10] sm:$0xff] %v683
      %716 = vst [vmem:[#allocation2 + $0x18] sm:$0xff] %v684
      %717 = vst [vmem:[#allocation2 + $0x20] sm:$0xff] %v685
      %718 = vst [vmem:[#allocation2 + $0x28] sm:$0xff] %v686
      %719 = vst [vmem:[#allocation2 + $0x30] sm:$0xff] %v687
      %720 = vst [vmem:[#allocation2 + $0x38] sm:$0xff] %v688
      %721 = vst [vmem:[#allocation2 + $0x40] sm:$0xff] %v689
      %722 = vst [vmem:[#allocation2 + $0x48] sm:$0xff] %v690
      %723 = vst [vmem:[#allocation2 + $0x50] sm:$0xff] %v691
      %724 = vst [vmem:[#allocation2 + $0x58] sm:$0xff] %v692
      %725 = vst [vmem:[#allocation2 + $0x60] sm:$0xff] %v693
      %726 = vst [vmem:[#allocation2 + $0x68] sm:$0xff] %v694
      %727 = vst [vmem:[#allocation2 + $0x70] sm:$0xff] %v695
      %728 = vst [vmem:[#allocation2 + $0x78] sm:$0xff] %v696
      %729 = vst [vmem:[#allocation2 + $0x80] sm:$0xff] %v697
      %730 = vst [vmem:[#allocation2 + $0x88] sm:$0xff] %v698
      %731 = vst [vmem:[#allocation2 + $0x90] sm:$0xff] %v699
      %732 = vst [vmem:[#allocation2 + $0x98] sm:$0xff] %v700
      %733 = vst [vmem:[#allocation2 + $0xa0] sm:$0xff] %v701
      %734 = vst [vmem:[#allocation2 + $0xa8] sm:$0xff] %v702
      %735 = vst [vmem:[#allocation2 + $0xb0] sm:$0xff] %v703
      %736 = vst [vmem:[#allocation2 + $0xb8] sm:$0xff] %v704
      %737 = vst [vmem:[#allocation2 + $0xc0] sm:$0xff] %v705
      %738 = vst [vmem:[#allocation2 + $0xc8] sm:$0xff] %v706
      %739 = vst [vmem:[#allocation2 + $0xd0] sm:$0xff] %v707
      %740 = vst [vmem:[#allocation2 + $0xd8] sm:$0xff] %v708
      %741 = vst [vmem:[#allocation2 + $0xe0] sm:$0xff] %v709
      %742 = vst [vmem:[#allocation2 + $0xe8] sm:$0xff] %v710
      %743 = vst [vmem:[#allocation2 + $0xf0] sm:$0xff] %v711
      %744 = vst [vmem:[#allocation2 + $0xf8] sm:$0xff] %v712
      // Predicated region
      $region37: #{rep_parallel_forward.1} parent=31 // pred_check
        %p745 = pneg %p260
      $region38: #{rep_parallel_forward.1} parent=31 // pred_check_branch
        %747 = sbr.rel (%p745) target = $region40
      $region39: #{rep_parallel_forward.1} parent=31 // pred_region
        %v748 = vld [vmem:[#allocation2] sm:$0xff]
        %v749 = vld [vmem:[#allocation2 + $0x8] sm:$0xff]
        %v750 = vld [vmem:[#allocation2 + $0x10] sm:$0xff]
        %v751 = vld [vmem:[#allocation2 + $0x18] sm:$0xff]
        %v752 = vld [vmem:[#allocation2 + $0x20] sm:$0xff]
        %v753 = vld [vmem:[#allocation2 + $0x28] sm:$0xff]
        %v754 = vld [vmem:[#allocation2 + $0x30] sm:$0xff]
        %v755 = vld [vmem:[#allocation2 + $0x38] sm:$0xff]
        %v756 = vld [vmem:[#allocation2 + $0x40] sm:$0xff]
        %v757 = vld [vmem:[#allocation2 + $0x48] sm:$0xff]
        %v758 = vld [vmem:[#allocation2 + $0x50] sm:$0xff]
        %v759 = vld [vmem:[#allocation2 + $0x58] sm:$0xff]
        %v760 = vld [vmem:[#allocation2 + $0x60] sm:$0xff]
        %v761 = vld [vmem:[#allocation2 + $0x68] sm:$0xff]
        %v762 = vld [vmem:[#allocation2 + $0x70] sm:$0xff]
        %v763 = vld [vmem:[#allocation2 + $0x78] sm:$0xff]
        %v764 = vld [vmem:[#allocation2 + $0x80] sm:$0xff]
        %v765 = vld [vmem:[#allocation2 + $0x88] sm:$0xff]
        %v766 = vld [vmem:[#allocation2 + $0x90] sm:$0xff]
        %v767 = vld [vmem:[#allocation2 + $0x98] sm:$0xff]
        %v768 = vld [vmem:[#allocation2 + $0xa0] sm:$0xff]
        %v769 = vld [vmem:[#allocation2 + $0xa8] sm:$0xff]
        %v770 = vld [vmem:[#allocation2 + $0xb0] sm:$0xff]
        %v771 = vld [vmem:[#allocation2 + $0xb8] sm:$0xff]
        %v772 = vld [vmem:[#allocation2 + $0xc0] sm:$0xff]
        %v773 = vld [vmem:[#allocation2 + $0xc8] sm:$0xff]
        %v774 = vld [vmem:[#allocation2 + $0xd0] sm:$0xff]
        %v775 = vld [vmem:[#allocation2 + $0xd8] sm:$0xff]
        %v776 = vld [vmem:[#allocation2 + $0xe0] sm:$0xff]
        %v777 = vld [vmem:[#allocation2 + $0xe8] sm:$0xff]
        %v778 = vld [vmem:[#allocation2 + $0xf0] sm:$0xff]
        %v779 = vld [vmem:[#allocation2 + $0xf8] sm:$0xff]
        %v780 = vld [vmem:[%s249] sm:$0x1]
        %v782 = vlaneseq
        %v783 = vshrl.u32 %v782, 7
        %v784 = vsub.s32 0, %v783
        %v785 = vrot.slane %v780, %v784
        %v787 = vadd.f32 %v748, %v785
        %v788 = vadd.f32 %v749, %v785
        %v789 = vadd.f32 %v750, %v785
        %v790 = vadd.f32 %v751, %v785
        %v791 = vadd.f32 %v752, %v785
        %v792 = vadd.f32 %v753, %v785
        %v793 = vadd.f32 %v754, %v785
        %v794 = vadd.f32 %v755, %v785
        %v795 = vadd.f32 %v756, %v785
        %v796 = vadd.f32 %v757, %v785
        %v797 = vadd.f32 %v758, %v785
        %v798 = vadd.f32 %v759, %v785
        %v799 = vadd.f32 %v760, %v785
        %v800 = vadd.f32 %v761, %v785
        %v801 = vadd.f32 %v762, %v785
        %v802 = vadd.f32 %v763, %v785
        %v803 = vadd.f32 %v764, %v785
        %v804 = vadd.f32 %v765, %v785
        %v805 = vadd.f32 %v766, %v785
        %v806 = vadd.f32 %v767, %v785
        %v807 = vadd.f32 %v768, %v785
        %v808 = vadd.f32 %v769, %v785
        %v809 = vadd.f32 %v770, %v785
        %v810 = vadd.f32 %v771, %v785
        %v811 = vadd.f32 %v772, %v785
        %v812 = vadd.f32 %v773, %v785
        %v813 = vadd.f32 %v774, %v785
        %v814 = vadd.f32 %v775, %v785
        %v815 = vadd.f32 %v776, %v785
        %v816 = vadd.f32 %v777, %v785
        %v817 = vadd.f32 %v778, %v785
        %v818 = vadd.f32 %v779, %v785
        %v819 = vpack.c.bf16 %v788, %v787
        %v820 = vpack.c.bf16 %v790, %v789
        %v821 = vpack.c.bf16 %v792, %v791
        %v822 = vpack.c.bf16 %v794, %v793
        %v823 = vpack.c.bf16 %v796, %v795
        %v824 = vpack.c.bf16 %v798, %v797
        %v825 = vpack.c.bf16 %v800, %v799
        %v826 = vpack.c.bf16 %v802, %v801
        %v827 = vpack.c.bf16 %v804, %v803
        %v828 = vpack.c.bf16 %v806, %v805
        %v829 = vpack.c.bf16 %v808, %v807
        %v830 = vpack.c.bf16 %v810, %v809
        %v831 = vpack.c.bf16 %v812, %v811
        %v832 = vpack.c.bf16 %v814, %v813
        %v833 = vpack.c.bf16 %v816, %v815
        %v834 = vpack.c.bf16 %v818, %v817
        %v851 = vunpack.c.l.b16 %v819
        %v852 = vunpack.c.h.b16 %v819
        %v853 = vunpack.c.l.b16 %v820
        %v854 = vunpack.c.h.b16 %v820
        %v855 = vunpack.c.l.b16 %v821
        %v856 = vunpack.c.h.b16 %v821
        %v857 = vunpack.c.l.b16 %v822
        %v858 = vunpack.c.h.b16 %v822
        %v859 = vunpack.c.l.b16 %v823
        %v860 = vunpack.c.h.b16 %v823
        %v861 = vunpack.c.l.b16 %v824
        %v862 = vunpack.c.h.b16 %v824
        %v863 = vunpack.c.l.b16 %v825
        %v864 = vunpack.c.h.b16 %v825
        %v865 = vunpack.c.l.b16 %v826
        %v866 = vunpack.c.h.b16 %v826
        %v867 = vunpack.c.l.b16 %v827
        %v868 = vunpack.c.h.b16 %v827
        %v869 = vunpack.c.l.b16 %v828
        %v870 = vunpack.c.h.b16 %v828
        %v871 = vunpack.c.l.b16 %v829
        %v872 = vunpack.c.h.b16 %v829
        %v873 = vunpack.c.l.b16 %v830
        %v874 = vunpack.c.h.b16 %v830
        %v875 = vunpack.c.l.b16 %v831
        %v876 = vunpack.c.h.b16 %v831
        %v877 = vunpack.c.l.b16 %v832
        %v878 = vunpack.c.h.b16 %v832
        %v879 = vunpack.c.l.b16 %v833
        %v880 = vunpack.c.h.b16 %v833
        %v881 = vunpack.c.l.b16 %v834
        %v882 = vunpack.c.h.b16 %v834
        %v883 = vpack.c.b16 %v851, %v851
        %v884 = vpack.c.b16 %v852, %v852
        %v885 = vpack.c.b16 %v853, %v853
        %v886 = vpack.c.b16 %v854, %v854
        %v887 = vpack.c.b16 %v855, %v855
        %v888 = vpack.c.b16 %v856, %v856
        %v889 = vpack.c.b16 %v857, %v857
        %v890 = vpack.c.b16 %v858, %v858
        %v891 = vpack.c.b16 %v859, %v859
        %v892 = vpack.c.b16 %v860, %v860
        %v893 = vpack.c.b16 %v861, %v861
        %v894 = vpack.c.b16 %v862, %v862
        %v895 = vpack.c.b16 %v863, %v863
        %v896 = vpack.c.b16 %v864, %v864
        %v897 = vpack.c.b16 %v865, %v865
        %v898 = vpack.c.b16 %v866, %v866
        %v899 = vpack.c.b16 %v867, %v867
        %v900 = vpack.c.b16 %v868, %v868
        %v901 = vpack.c.b16 %v869, %v869
        %v902 = vpack.c.b16 %v870, %v870
        %v903 = vpack.c.b16 %v871, %v871
        %v904 = vpack.c.b16 %v872, %v872
        %v905 = vpack.c.b16 %v873, %v873
        %v906 = vpack.c.b16 %v874, %v874
        %v907 = vpack.c.b16 %v875, %v875
        %v908 = vpack.c.b16 %v876, %v876
        %v909 = vpack.c.b16 %v877, %v877
        %v910 = vpack.c.b16 %v878, %v878
        %v911 = vpack.c.b16 %v879, %v879
        %v912 = vpack.c.b16 %v880, %v880
        %v913 = vpack.c.b16 %v881, %v881
        %v914 = vpack.c.b16 %v882, %v882
        %947 = vst [vmem:[%s257] sm:$0xf] %v883
        %948 = vst [vmem:[%s257 + $0x4] sm:$0xf] %v884
        %949 = vst [vmem:[%s257 + $0x8] sm:$0xf] %v885
        %950 = vst [vmem:[%s257 + $0xc] sm:$0xf] %v886
        %951 = vst [vmem:[%s257 + $0x10] sm:$0xf] %v887
        %952 = vst [vmem:[%s257 + $0x14] sm:$0xf] %v888
        %953 = vst [vmem:[%s257 + $0x18] sm:$0xf] %v889
        %954 = vst [vmem:[%s257 + $0x1c] sm:$0xf] %v890
        %955 = vst [vmem:[%s257 + $0x20] sm:$0xf] %v891
        %956 = vst [vmem:[%s257 + $0x24] sm:$0xf] %v892
        %957 = vst [vmem:[%s257 + $0x28] sm:$0xf] %v893
        %958 = vst [vmem:[%s257 + $0x2c] sm:$0xf] %v894
        %959 = vst [vmem:[%s257 + $0x30] sm:$0xf] %v895
        %960 = vst [vmem:[%s257 + $0x34] sm:$0xf] %v896
        %961 = vst [vmem:[%s257 + $0x38] sm:$0xf] %v897
        %962 = vst [vmem:[%s257 + $0x3c] sm:$0xf] %v898
        %963 = vst [vmem:[%s257 + $0x40] sm:$0xf] %v899
        %964 = vst [vmem:[%s257 + $0x44] sm:$0xf] %v900
        %965 = vst [vmem:[%s257 + $0x48] sm:$0xf] %v901
        %966 = vst [vmem:[%s257 + $0x4c] sm:$0xf] %v902
        %967 = vst [vmem:[%s257 + $0x50] sm:$0xf] %v903
        %968 = vst [vmem:[%s257 + $0x54] sm:$0xf] %v904
        %969 = vst [vmem:[%s257 + $0x58] sm:$0xf] %v905
        %970 = vst [vmem:[%s257 + $0x5c] sm:$0xf] %v906
        %971 = vst [vmem:[%s257 + $0x60] sm:$0xf] %v907
        %972 = vst [vmem:[%s257 + $0x64] sm:$0xf] %v908
        %973 = vst [vmem:[%s257 + $0x68] sm:$0xf] %v909
        %974 = vst [vmem:[%s257 + $0x6c] sm:$0xf] %v910
        %975 = vst [vmem:[%s257 + $0x70] sm:$0xf] %v911
        %976 = vst [vmem:[%s257 + $0x74] sm:$0xf] %v912
        %977 = vst [vmem:[%s257 + $0x78] sm:$0xf] %v913
        %978 = vst [vmem:[%s257 + $0x7c] sm:$0xf] %v914
      $region40: #{rep_parallel_forward.1} parent=31 // pred_fallthru
        _
      %s979 = smul.u32 32, %s19
      %p980 = scmp.lt.s32.totalorder %s979, 63
      %s981 = scalar_select %p980, %s979, 63
      %p982 = scmp.lt.s32.totalorder %s20, 0
      %s983 = scalar_select %p982, %s20, 0
      %s984 = sadd.s32 %s983, %s981
      %s985 = smul.addr %s984, 4
      %s986 = scalar_lea.vmem %s3, %s985
      // Predicated region
      $region41: #{rep_parallel_forward.1} parent=31 // pred_check
        %p987 = pneg %p135
      $region42: #{rep_parallel_forward.1} parent=31 // pred_check_branch
        %989 = sbr.rel (%p987) target = $region44
      $region43: #{rep_parallel_forward.1} parent=31 // pred_region
        %s990 = smul.u32 32, %s19
      $region44: #{rep_parallel_forward.1} parent=31 // pred_fallthru
        _
    $region32: #{rep_parallel_forward.1} parent=5 // pred_fallthru
      _
    %p991 = scmp.le.s32.totalorder 2, %s9
    // Predicated region
    $region45: #{rep_parallel_forward.1} parent=5 // pred_check
      %p992 = pneg %p991
    $region46: #{rep_parallel_forward.1} parent=5 // pred_check_branch
      %994 = sbr.rel (%p992) target = $region48
    $region47: #{rep_parallel_forward.1} parent=5 // pred_region
      %s995 = ssub.s32 %s9, 2
      // Predicated region
      $region49: #{rep_parallel_forward.1} parent=47 // pred_check
        %p996 = pneg %p141
      $region50: #{rep_parallel_forward.1} parent=47 // pred_check_branch
        %998 = sbr.rel (%p996) target = $region52
      $region51: #{rep_parallel_forward.1} parent=47 // pred_region
        %s999 = smul.u32 32, %s22
        %p1000 = scmp.lt.s32.totalorder %s999, 63
        %s1001 = scalar_select %p1000, %s999, 63
        %p1002 = scmp.lt.s32.totalorder %s23, 0
        %s1003 = scalar_select %p1002, %s23, 0
        %s1004 = sadd.s32 %s1003, %s1001
        %s1005 = smul.addr %s1004, 4
        %s1006 = scalar_lea.vmem %s3, %s1005
      $region52: #{rep_parallel_forward.1} parent=47 // pred_fallthru
        _
    $region48: #{rep_parallel_forward.1} parent=5 // pred_fallthru
      _
  $region6: #{rep_parallel_forward.1} parent=0 // loop_footer
    %s13 = sadd.s32 1, %s9
  $region7: #{rep_parallel_forward.1} parent=0 // loop_footer_branch
    %8 = sbr.rel target = $region3
  $region8: #{rep_parallel_forward.1} parent=0 // loop_exit
    _

</llo_original>
